<compile_context>
chip_gen: v5e
topology: v5e:2x2
jax: 0.10.0
libtpu: 0.0.40
codegen_flags: <defaults>
</compile_context>

<pallas_src>
import functools

import jax
import jax.numpy as jnp
from jax.experimental import pallas as pl
from jax.experimental.pallas import tpu as pltpu

_LANE = 128
_SUBLANE = 8
_VMEM_BUDGET = 24 * 1024 * 1024  # headroom under v7x's 32 MiB default scoped VMEM


def _round_up(x, m):
    return ((x + m - 1) // m) * m


def _choose_tiles(b, f, c_pad, x_bytes, w_bytes):
    """Pick (tm, tk) so the double-buffered working set fits _VMEM_BUDGET."""

    def footprint(tm, tk):
        return (2 * tm * tk * x_bytes        # x tile (double-buffered)
                + 2 * tk * c_pad * w_bytes   # W tile (double-buffered)
                + 2 * tm * c_pad * 4         # logits tile (double-buffered)
                + tm * c_pad * 4             # f32 accumulator scratch
                + 2 * c_pad * 4)             # bias

    # K (feature) tile: whole feature dim when it fits comfortably, else a
    # lane-aligned slab (v7x large-num_ftrs path: K axis becomes a real loop).
    tk = f
    while tk > _LANE and footprint(_SUBLANE, tk) > _VMEM_BUDGET // 2:
        tk = max(_LANE, _round_up(tk // 2, _LANE))

    # Batch tile: 512-1024 rows hits the measured HBM-roofline sweet spot.
    tm = min(b, 1024)
    while tm > _SUBLANE and footprint(tm, tk) > _VMEM_BUDGET:
        tm = max(_SUBLANE, tm // 2)
    # Prefer a tm that divides B so the last block is not partial/masked.
    if b > tm and b % tm != 0:
        for cand in range(tm, _SUBLANE - 1, -_SUBLANE):
            if b % cand == 0:
                tm = cand
                break
    return tm, tk


def _fc4_kernel(x_ref, w_ref, b_ref, out_ref, acc_ref):
    # x_ref:   (TM, TK)       flattened-feature batch tile (bf16)
    # w_ref:   (TK, C_pad)    fc_4 weight, pre-transposed + zero-padded (bf16)
    # b_ref:   (1, C_pad)     fc_4 bias, zero-padded (f32)
    # out_ref: (TM, C_pad)    logits tile, lane-dense (f32)
    # acc_ref: (TM, C_pad)    f32 accumulator scratch
    k = pl.program_id(1)

    @pl.when(k == 0)
    def _():
        acc_ref[...] = jnp.zeros_like(acc_ref)

    acc_ref[...] += jnp.dot(x_ref[...], w_ref[...],
                            preferred_element_type=jnp.float32)

    @pl.when(k == pl.num_programs(1) - 1)
    def _():
        out_ref[...] = (acc_ref[...] + b_ref[...]).astype(out_ref.dtype)


def init_fc4_params(fc_weight, fc_bias, compute_dtype=jnp.bfloat16):
    """One-time (model-init) prep: pad classes to 128 lanes and pre-transpose
    the torch (out, in) weight into MXU-native (in, out_padded) layout."""
    num_classes, num_ftrs = fc_weight.shape
    c_pad = _round_up(max(num_classes, _LANE), _LANE)
    w_pad = jnp.zeros((num_ftrs, c_pad), compute_dtype)
    w_pad = w_pad.at[:, :num_classes].set(fc_weight.T.astype(compute_dtype))
    b_pad = jnp.zeros((1, c_pad), jnp.float32)
    b_pad = b_pad.at[0, :num_classes].set(fc_bias.astype(jnp.float32))
    return w_pad, b_pad


@functools.partial(jax.jit, static_argnames=("num_classes",))
def fully_connected_forward(x_nchw, w_pad, b_pad, *, num_classes):
    """Pallas port of fully_connected.forward.

    Returns (out_1, out_3): out_1 is what the PyTorch module returns
    (flatten(model(x), 1)); out_3 = fc_4(x) is computed -- exactly as the
    module does -- and exposed here for verification (the module discards it).
    """
    # TODO(synk): self.model is an externally supplied backbone whose
    # architecture is not defined in this module; treated as identity.
    b = x_nchw.shape[0]
    x_flat = x_nchw.reshape(b, -1)                 # torch.flatten(x, 1): metadata only
    num_ftrs = x_flat.shape[1]
    c_pad = w_pad.shape[1]

    out_1 = x_flat                                 # no copy kernel, no extra HBM traffic

    # bf16 feed to the MXU (f32 accumulate in the kernel keeps precision).
    x_compute = x_flat.astype(w_pad.dtype)

    tm, tk = _choose_tiles(b, num_ftrs, c_pad,
                           x_compute.dtype.itemsize, w_pad.dtype.itemsize)
    grid = (pl.cdiv(b, tm), pl.cdiv(num_ftrs, tk))

    logits_pad = pl.pallas_call(
        _fc4_kernel,
        out_shape=jax.ShapeDtypeStruct((b, c_pad), jnp.float32),
        grid_spec=pltpu.PrefetchScalarGridSpec(
            num_scalar_prefetch=0,
            grid=grid,
            in_specs=[
                pl.BlockSpec((tm, tk), lambda i, k: (i, k)),
                pl.BlockSpec((tk, c_pad), lambda i, k: (k, 0)),
                pl.BlockSpec((1, c_pad), lambda i, k: (0, 0)),
            ],
            out_specs=pl.BlockSpec((tm, c_pad), lambda i, k: (i, 0)),
            scratch_shapes=[pltpu.VMEM((tm, c_pad), jnp.float32)],
        ),
        compiler_params=pltpu.CompilerParams(
            # batch tiles shard across v7x's two TCs; K is a reduction.
            dimension_semantics=("parallel", "arbitrary"),
        ),
    )(x_compute, w_pad, b_pad)

    out_3 = logits_pad[:, :num_classes]
    return out_1, out_3


if __name__ == "__main__":
    key = jax.random.PRNGKey(0)
    k_x, k_w, k_b = jax.random.split(key, 3)

    # Small shapes consistent with the module: NCHW conv-style input.
    B, C, H, W = 2, 4, 16, 16
    num_ftrs = C * H * W          # 1024
    num_classes = 8               # small synthetic class count

    x = jax.random.normal(k_x, (B, C, H, W), dtype=jnp.float32)
    # Deterministic synthetic fc_4 parameters (PyTorch layout: (out, in)).
    fc_w = jax.random.normal(k_w, (num_classes, num_ftrs), dtype=jnp.float32) * 0.02
    fc_b = jax.random.normal(k_b, (num_classes,), dtype=jnp.float32) * 0.02

    # One-time param prep (done at model init in real use).
    w_pad, b_pad = init_fc4_params(fc_w, fc_b)

    out_1, out_3 = fully_connected_forward(x, w_pad, b_pad, num_classes=num_classes)
    jax.block_until_ready((out_1, out_3))

    # out_1 (the module's return value) must equal flatten(x, 1) exactly.
    ref_1 = x.reshape(B, -1)
    assert out_1.shape == (B, num_ftrs)
    assert jnp.array_equal(out_1, ref_1), "out_1 mismatch vs torch.flatten semantics"

    # out_3 must match fc_4(x) = x @ W^T + b (bf16 MXU feed, f32 accumulate).
    ref_3 = ref_1 @ fc_w.T + fc_b
    assert out_3.shape == (B, num_classes)
    assert jnp.allclose(out_3, ref_3, rtol=2e-2, atol=2e-2), "out_3 mismatch vs fc_4 reference"

    print("KERNEL_OK")
</pallas_src>

<mosaic_0001>
module attributes {stable_mosaic.version = 11 : i64} {
  func.func @_fc4_kernel(%arg0: i32, %arg1: i32, %arg2: memref<2x1024xbf16, #tpu.memory_space<vmem>>, %arg3: memref<1024x128xbf16, #tpu.memory_space<vmem>>, %arg4: memref<1x128xf32, #tpu.memory_space<vmem>>, %arg5: memref<2x128xf32, #tpu.memory_space<vmem>>, %arg6: memref<2x128xf32, #tpu.memory_space<vmem>>) attributes {dimension_semantics = [#tpu.dimension_semantics<parallel>, #tpu.dimension_semantics<arbitrary>], iteration_bounds = array<i64: 1, 1>, scalar_prefetch = 0 : i64, scratch_operands = 1 : i64, tpu.core_type = #tpu.core_type<tc>, window_params = [{transform_indices = @transform_0, window_bounds = array<i64: 2, 1024>}, {transform_indices = @transform_1, window_bounds = array<i64: 1024, 128>}, {pipeline_mode = #tpu.pipeline_mode<synchronous>, transform_indices = @transform_2, window_bounds = array<i64: 1, 128>}, {transform_indices = @transform_3, window_bounds = array<i64: 2, 128>}]} {
    %c0_i32 = arith.constant 0 : i32
    %0 = arith.cmpi eq, %arg1, %c0_i32 : i32
    %1 = arith.extui %0 : i1 to i32
    %c0_i32_0 = arith.constant 0 : i32
    %2 = arith.cmpi ne, %1, %c0_i32_0 : i32
    scf.if %2 {
      %cst_10 = arith.constant 0.000000e+00 : f32
      %12 = vector.broadcast %cst_10 : f32 to vector<2x128xf32>
      %c0_11 = arith.constant 0 : index
      %c0_12 = arith.constant 0 : index
      %13 = vector.load %arg6[%c0_11, %c0_12] : memref<2x128xf32, #tpu.memory_space<vmem>>, vector<2x128xf32>
      tpu.vector_store %arg6[%c0_11, %c0_12], %12 {strides = array<i32>} : memref<2x128xf32, #tpu.memory_space<vmem>>, vector<2x128xf32>,
    } else {
    }
    %c0 = arith.constant 0 : index
    %c0_1 = arith.constant 0 : index
    %3 = vector.load %arg6[%c0, %c0_1] : memref<2x128xf32, #tpu.memory_space<vmem>>, vector<2x128xf32>
    %c0_2 = arith.constant 0 : index
    %c0_3 = arith.constant 0 : index
    %4 = vector.load %arg2[%c0_2, %c0_3] : memref<2x1024xbf16, #tpu.memory_space<vmem>>, vector<2x1024xbf16>
    %c0_4 = arith.constant 0 : index
    %c0_5 = arith.constant 0 : index
    %5 = vector.load %arg3[%c0_4, %c0_5] : memref<1024x128xbf16, #tpu.memory_space<vmem>>, vector<1024x128xbf16>
    %cst = arith.constant dense<0.000000e+00> : vector<2x128xf32>
    %6 = tpu.matmul %4, %5, %cst {dimension_numbers = #tpu.dot_dimension_numbers<[1], [0], [0], [1], [0, 0, 1, 1], [], []>} : vector<2x1024xbf16>, vector<1024x128xbf16>, vector<2x128xf32> -> vector<2x128xf32>
    %7 = arith.addf %3, %6 : vector<2x128xf32>
    %c0_6 = arith.constant 0 : index
    %c0_7 = arith.constant 0 : index
    %8 = vector.load %arg6[%c0_6, %c0_7] : memref<2x128xf32, #tpu.memory_space<vmem>>, vector<2x128xf32>
    tpu.vector_store %arg6[%c0_6, %c0_7], %7 {strides = array<i32>} : memref<2x128xf32, #tpu.memory_space<vmem>>, vector<2x128xf32>,
    %c0_i32_8 = arith.constant 0 : i32
    %9 = arith.cmpi eq, %arg1, %c0_i32_8 : i32
    %10 = arith.extui %9 : i1 to i32
    %c0_i32_9 = arith.constant 0 : i32
    %11 = arith.cmpi ne, %10, %c0_i32_9 : i32
    scf.if %11 {
      %c0_10 = arith.constant 0 : index
      %c0_11 = arith.constant 0 : index
      %12 = vector.load %arg6[%c0_10, %c0_11] : memref<2x128xf32, #tpu.memory_space<vmem>>, vector<2x128xf32>
      %c0_12 = arith.constant 0 : index
      %c0_13 = arith.constant 0 : index
      %13 = vector.load %arg4[%c0_12, %c0_13] : memref<1x128xf32, #tpu.memory_space<vmem>>, vector<1x128xf32>
      %14 = vector.broadcast %13 : vector<1x128xf32> to vector<2x128xf32>
      %15 = arith.addf %12, %14 : vector<2x128xf32>
      %c0_14 = arith.constant 0 : index
      %c0_15 = arith.constant 0 : index
      %16 = vector.load %arg5[%c0_14, %c0_15] : memref<2x128xf32, #tpu.memory_space<vmem>>, vector<2x128xf32>
      tpu.vector_store %arg5[%c0_14, %c0_15], %15 {strides = array<i32>} : memref<2x128xf32, #tpu.memory_space<vmem>>, vector<2x128xf32>,
    } else {
    }
    return
  }
  func.func @transform_0(%arg0: i32, %arg1: i32) -> (i32, i32) {
    %c0_i32 = arith.constant 0 : i32
    return %arg0, %arg1 : i32, i32
  }
  func.func @transform_1(%arg0: i32, %arg1: i32) -> (i32, i32) {
    %c0_i32 = arith.constant 0 : i32
    %c0_i32_0 = arith.constant 0 : i32
    return %arg1, %c0_i32 : i32, i32
  }
  func.func @transform_2(%arg0: i32, %arg1: i32) -> (i32, i32) {
    %c0_i32 = arith.constant 0 : i32
    %c0_i32_0 = arith.constant 0 : i32
    %c0_i32_1 = arith.constant 0 : i32
    return %c0_i32, %c0_i32_0 : i32, i32
  }
  func.func @transform_3(%arg0: i32, %arg1: i32) -> (i32, i32) {
    %c0_i32 = arith.constant 0 : i32
    %c0_i32_0 = arith.constant 0 : i32
    return %arg0, %c0_i32 : i32, i32
  }
}

</mosaic_0001>

<llo_original>
// kernel: fully_connected_forward.1
$region0: #{fully_connected_forward.1}
  #allocation0 [shape = 'u32[]', space=smem, size = 0x4, offset = 0x4, fixed_abs, tag = 'smem constant byte address 0x4 - core index']
  #allocation1 [shape = 'u32[72,128]{1,0:T(1,128)}', space=vmem, size = 0x9000, scoped, tag = 'internal scratch']
  #allocation2 [shape = 'f32[2,128]{1,0:T(2,128)}', space=vmem, size = 0x400, scoped, tag = 'scratch operand']
  %s0 = inlined_call_operand.vmem [shape: bf16[2,1024], index: 0, kind: input, shape index: {}]
  %s1 = inlined_call_operand.hbm [shape: bf16[1024,128], index: 1, kind: input, shape index: {}]
  %s2 = inlined_call_operand.vmem [shape: f32[1,128], index: 2, kind: input, shape index: {}]
  %s3 = inlined_call_operand.hbm [shape: f32[2,128], index: 3, kind: output, shape index: {}]
  %s4 = sld [smem:[#allocation0]]
  $region34: #{fully_connected_forward.1} parent=0
    _
  %s6 = ssub.s32 1, %s4
  %s7 = scalar_select 0, %s6, %s4
  $region1: #{fully_connected_forward.1} parent=0
    #allocation3 [shape = 'u8[262144]{0}', space=vmem, size = 0x40000, scoped, tag = 'input window, operand 1, single buffered']
    #allocation4 [shape = 's32[1]{0}', space=sflag, size = 0x4, scoped, tag = 'scoped memory for fully_connected_forward.1']
    #allocation5 [shape = 's32[1]{0}', space=sflag, size = 0x4, scoped, tag = 'scoped memory for fully_connected_forward.1']
    #allocation6 [shape = 'u8[1024]{0}', space=vmem, size = 0x400, scoped, tag = 'output window, operand 0, single buffered']
    %8 = vsyncpa [#allocation4], 0
    %9 = vsyncpa [#allocation5], 0
    // Predicated region
    $region2: #{fully_connected_forward.1} parent=1 // pred_check
      _
    $region3: #{fully_connected_forward.1} parent=1 // pred_check_branch
      %11 = sbr.rel (0) target = $region5
    $region4: #{fully_connected_forward.1} parent=1 // pred_region
      _
    $region5: #{fully_connected_forward.1} parent=1 // pred_fallthru
      _
    // Predicated region
    $region6: #{fully_connected_forward.1} parent=1 // pred_check
      _
    $region7: #{fully_connected_forward.1} parent=1 // pred_check_branch
      %13 = sbr.rel (0) target = $region9
    $region8: #{fully_connected_forward.1} parent=1 // pred_region
      %15 = vsyncadd [#allocation4], 0
      %s16 = sshll.u32 %s1, 4
      %s17 = int_to_ptr.hbm [resolvable:$true] %s16
      %s18 = sshll.u32 [#allocation3], 4
      %s19 = int_to_ptr.vmem [resolvable:$true] %s18
      %24 = dma.hbm_to_vmem [thread:$0]  %s17, 8192, %s19, [#allocation4], 64, 64, 4
    $region9: #{fully_connected_forward.1} parent=1 // pred_fallthru
      _
    // Predicated region
    $region10: #{fully_connected_forward.1} parent=1 // pred_check
      _
    $region11: #{fully_connected_forward.1} parent=1 // pred_check_branch
      %26 = sbr.rel (0) target = $region13
    $region12: #{fully_connected_forward.1} parent=1 // pred_region
      _
    $region13: #{fully_connected_forward.1} parent=1 // pred_fallthru
      _
    // Predicated region
    $region14: #{fully_connected_forward.1} parent=1 // pred_check
      _
    $region15: #{fully_connected_forward.1} parent=1 // pred_check_branch
      %28 = sbr.rel (0) target = $region17
    $region16: #{fully_connected_forward.1} parent=1 // pred_region
      %30 = dma.done [#allocation4], 8192
    $region17: #{fully_connected_forward.1} parent=1 // pred_fallthru
      _
    %p31 = scmp.eq.s32.totalorder 0, 0
    // Predicated region
    $region18: #{fully_connected_forward.1} parent=1 // pred_check
      %p32 = pneg %p31
    $region19: #{fully_connected_forward.1} parent=1 // pred_check_branch
      %34 = sbr.rel (%p32) target = $region21
    $region20: #{fully_connected_forward.1} parent=1 // pred_region
      %35 = vst [vmem:[#allocation2] sm:$0x3] 0.0
    $region21: #{fully_connected_forward.1} parent=1 // pred_fallthru
      _
    %v36 = vld [vmem:[#allocation2] sm:$0x3]
    %v37 = vld [vmem:[%s0] sm:$0xff]
    %v38 = vld [vmem:[#allocation3] sm:$0xf]
    %v39 = vld [vmem:[#allocation3 + $0x4] sm:$0xf]
    %v40 = vld [vmem:[#allocation3 + $0x8] sm:$0xf]
    %v41 = vld [vmem:[#allocation3 + $0xc] sm:$0xf]
    %v42 = vld [vmem:[#allocation3 + $0x10] sm:$0xf]
    %v43 = vld [vmem:[#allocation3 + $0x14] sm:$0xf]
    %v44 = vld [vmem:[#allocation3 + $0x18] sm:$0xf]
    %v45 = vld [vmem:[#allocation3 + $0x1c] sm:$0xf]
    %v46 = vld [vmem:[#allocation3 + $0x20] sm:$0xf]
    %v47 = vld [vmem:[#allocation3 + $0x24] sm:$0xf]
    %v48 = vld [vmem:[#allocation3 + $0x28] sm:$0xf]
    %v49 = vld [vmem:[#allocation3 + $0x2c] sm:$0xf]
    %v50 = vld [vmem:[#allocation3 + $0x30] sm:$0xf]
    %v51 = vld [vmem:[#allocation3 + $0x34] sm:$0xf]
    %v52 = vld [vmem:[#allocation3 + $0x38] sm:$0xf]
    %v53 = vld [vmem:[#allocation3 + $0x3c] sm:$0xf]
    %v54 = vld [vmem:[#allocation3 + $0x40] sm:$0xf]
    %v55 = vld [vmem:[#allocation3 + $0x44] sm:$0xf]
    %v56 = vld [vmem:[#allocation3 + $0x48] sm:$0xf]
    %v57 = vld [vmem:[#allocation3 + $0x4c] sm:$0xf]
    %v58 = vld [vmem:[#allocation3 + $0x50] sm:$0xf]
    %v59 = vld [vmem:[#allocation3 + $0x54] sm:$0xf]
    %v60 = vld [vmem:[#allocation3 + $0x58] sm:$0xf]
    %v61 = vld [vmem:[#allocation3 + $0x5c] sm:$0xf]
    %v62 = vld [vmem:[#allocation3 + $0x60] sm:$0xf]
    %v63 = vld [vmem:[#allocation3 + $0x64] sm:$0xf]
    %v64 = vld [vmem:[#allocation3 + $0x68] sm:$0xf]
    %v65 = vld [vmem:[#allocation3 + $0x6c] sm:$0xf]
    %v66 = vld [vmem:[#allocation3 + $0x70] sm:$0xf]
    %v67 = vld [vmem:[#allocation3 + $0x74] sm:$0xf]
    %v68 = vld [vmem:[#allocation3 + $0x78] sm:$0xf]
    %v69 = vld [vmem:[#allocation3 + $0x7c] sm:$0xf]
    %v70 = vld [vmem:[#allocation3 + $0x80] sm:$0xf]
    %v71 = vld [vmem:[#allocation3 + $0x84] sm:$0xf]
    %v72 = vld [vmem:[#allocation3 + $0x88] sm:$0xf]
    %v73 = vld [vmem:[#allocation3 + $0x8c] sm:$0xf]
    %v74 = vld [vmem:[#allocation3 + $0x90] sm:$0xf]
    %v75 = vld [vmem:[#allocation3 + $0x94] sm:$0xf]
    %v76 = vld [vmem:[#allocation3 + $0x98] sm:$0xf]
    %v77 = vld [vmem:[#allocation3 + $0x9c] sm:$0xf]
    %v78 = vld [vmem:[#allocation3 + $0xa0] sm:$0xf]
    %v79 = vld [vmem:[#allocation3 + $0xa4] sm:$0xf]
    %v80 = vld [vmem:[#allocation3 + $0xa8] sm:$0xf]
    %v81 = vld [vmem:[#allocation3 + $0xac] sm:$0xf]
    %v82 = vld [vmem:[#allocation3 + $0xb0] sm:$0xf]
    %v83 = vld [vmem:[#allocation3 + $0xb4] sm:$0xf]
    %v84 = vld [vmem:[#allocation3 + $0xb8] sm:$0xf]
    %v85 = vld [vmem:[#allocation3 + $0xbc] sm:$0xf]
    %v86 = vld [vmem:[#allocation3 + $0xc0] sm:$0xf]
    %v87 = vld [vmem:[#allocation3 + $0xc4] sm:$0xf]
    %v88 = vld [vmem:[#allocation3 + $0xc8] sm:$0xf]
    %v89 = vld [vmem:[#allocation3 + $0xcc] sm:$0xf]
    %v90 = vld [vmem:[#allocation3 + $0xd0] sm:$0xf]
    %v91 = vld [vmem:[#allocation3 + $0xd4] sm:$0xf]
    %v92 = vld [vmem:[#allocation3 + $0xd8] sm:$0xf]
    %v93 = vld [vmem:[#allocation3 + $0xdc] sm:$0xf]
    %v94 = vld [vmem:[#allocation3 + $0xe0] sm:$0xf]
    %v95 = vld [vmem:[#allocation3 + $0xe4] sm:$0xf]
    %v96 = vld [vmem:[#allocation3 + $0xe8] sm:$0xf]
    %v97 = vld [vmem:[#allocation3 + $0xec] sm:$0xf]
    %v98 = vld [vmem:[#allocation3 + $0xf0] sm:$0xf]
    %v99 = vld [vmem:[#allocation3 + $0xf4] sm:$0xf]
    %v100 = vld [vmem:[#allocation3 + $0xf8] sm:$0xf]
    %v101 = vld [vmem:[#allocation3 + $0xfc] sm:$0xf]
    %v102 = vld [vmem:[#allocation3 + $0x100] sm:$0xf]
    %v103 = vld [vmem:[#allocation3 + $0x104] sm:$0xf]
    %v104 = vld [vmem:[#allocation3 + $0x108] sm:$0xf]
    %v105 = vld [vmem:[#allocation3 + $0x10c] sm:$0xf]
    %v106 = vld [vmem:[#allocation3 + $0x110] sm:$0xf]
    %v107 = vld [vmem:[#allocation3 + $0x114] sm:$0xf]
    %v108 = vld [vmem:[#allocation3 + $0x118] sm:$0xf]
    %v109 = vld [vmem:[#allocation3 + $0x11c] sm:$0xf]
    %v110 = vld [vmem:[#allocation3 + $0x120] sm:$0xf]
    %v111 = vld [vmem:[#allocation3 + $0x124] sm:$0xf]
    %v112 = vld [vmem:[#allocation3 + $0x128] sm:$0xf]
    %v113 = vld [vmem:[#allocation3 + $0x12c] sm:$0xf]
    %v114 = vld [vmem:[#allocation3 + $0x130] sm:$0xf]
    %v115 = vld [vmem:[#allocation3 + $0x134] sm:$0xf]
    %v116 = vld [vmem:[#allocation3 + $0x138] sm:$0xf]
    %v117 = vld [vmem:[#allocation3 + $0x13c] sm:$0xf]
    %v118 = vld [vmem:[#allocation3 + $0x140] sm:$0xf]
    %v119 = vld [vmem:[#allocation3 + $0x144] sm:$0xf]
    %v120 = vld [vmem:[#allocation3 + $0x148] sm:$0xf]
    %v121 = vld [vmem:[#allocation3 + $0x14c] sm:$0xf]
    %v122 = vld [vmem:[#allocation3 + $0x150] sm:$0xf]
    %v123 = vld [vmem:[#allocation3 + $0x154] sm:$0xf]
    %v124 = vld [vmem:[#allocation3 + $0x158] sm:$0xf]
    %v125 = vld [vmem:[#allocation3 + $0x15c] sm:$0xf]
    %v126 = vld [vmem:[#allocation3 + $0x160] sm:$0xf]
    %v127 = vld [vmem:[#allocation3 + $0x164] sm:$0xf]
    %v128 = vld [vmem:[#allocation3 + $0x168] sm:$0xf]
    %v129 = vld [vmem:[#allocation3 + $0x16c] sm:$0xf]
    %v130 = vld [vmem:[#allocation3 + $0x170] sm:$0xf]
    %v131 = vld [vmem:[#allocation3 + $0x174] sm:$0xf]
    %v132 = vld [vmem:[#allocation3 + $0x178] sm:$0xf]
    %v133 = vld [vmem:[#allocation3 + $0x17c] sm:$0xf]
    %v134 = vld [vmem:[#allocation3 + $0x180] sm:$0xf]
    %v135 = vld [vmem:[#allocation3 + $0x184] sm:$0xf]
    %v136 = vld [vmem:[#allocation3 + $0x188] sm:$0xf]
    %v137 = vld [vmem:[#allocation3 + $0x18c] sm:$0xf]
    %v138 = vld [vmem:[#allocation3 + $0x190] sm:$0xf]
    %v139 = vld [vmem:[#allocation3 + $0x194] sm:$0xf]
    %v140 = vld [vmem:[#allocation3 + $0x198] sm:$0xf]
    %v141 = vld [vmem:[#allocation3 + $0x19c] sm:$0xf]
    %v142 = vld [vmem:[#allocation3 + $0x1a0] sm:$0xf]
    %v143 = vld [vmem:[#allocation3 + $0x1a4] sm:$0xf]
    %v144 = vld [vmem:[#allocation3 + $0x1a8] sm:$0xf]
    %v145 = vld [vmem:[#allocation3 + $0x1ac] sm:$0xf]
    %v146 = vld [vmem:[#allocation3 + $0x1b0] sm:$0xf]
    %v147 = vld [vmem:[#allocation3 + $0x1b4] sm:$0xf]
    %v148 = vld [vmem:[#allocation3 + $0x1b8] sm:$0xf]
    %v149 = vld [vmem:[#allocation3 + $0x1bc] sm:$0xf]
    %v150 = vld [vmem:[#allocation3 + $0x1c0] sm:$0xf]
    %v151 = vld [vmem:[#allocation3 + $0x1c4] sm:$0xf]
    %v152 = vld [vmem:[#allocation3 + $0x1c8] sm:$0xf]
    %v153 = vld [vmem:[#allocation3 + $0x1cc] sm:$0xf]
    %v154 = vld [vmem:[#allocation3 + $0x1d0] sm:$0xf]
    %v155 = vld [vmem:[#allocation3 + $0x1d4] sm:$0xf]
    %v156 = vld [vmem:[#allocation3 + $0x1d8] sm:$0xf]
    %v157 = vld [vmem:[#allocation3 + $0x1dc] sm:$0xf]
    %v158 = vld [vmem:[#allocation3 + $0x1e0] sm:$0xf]
    %v159 = vld [vmem:[#allocation3 + $0x1e4] sm:$0xf]
    %v160 = vld [vmem:[#allocation3 + $0x1e8] sm:$0xf]
    %v161 = vld [vmem:[#allocation3 + $0x1ec] sm:$0xf]
    %v162 = vld [vmem:[#allocation3 + $0x1f0] sm:$0xf]
    %v163 = vld [vmem:[#allocation3 + $0x1f4] sm:$0xf]
    %v164 = vld [vmem:[#allocation3 + $0x1f8] sm:$0xf]
    %v165 = vld [vmem:[#allocation3 + $0x1fc] sm:$0xf]
    %167 = vst [vmem:[#allocation1] ss:$9 sm:$0xff] %v37
    %v168 = vld [vmem:[#allocation1] sm:$0xff]
    %v169 = vld [vmem:[#allocation1 + $0x9] sm:$0xff]
    %v170 = vld [vmem:[#allocation1 + $0x12] sm:$0xff]
    %v171 = vld [vmem:[#allocation1 + $0x1b] sm:$0xff]
    %v172 = vld [vmem:[#allocation1 + $0x24] sm:$0xff]
    %v173 = vld [vmem:[#allocation1 + $0x2d] sm:$0xff]
    %v174 = vld [vmem:[#allocation1 + $0x36] sm:$0xff]
    %v175 = vld [vmem:[#allocation1 + $0x3f] sm:$0xff]
    %v312 = vunpack.c.l.b16 %v38
    %v313 = vunpack.c.l.b16 %v39
    %v314 = vunpack.c.l.b16 %v40
    %v315 = vunpack.c.l.b16 %v41
    %v316 = vunpack.c.l.b16 %v42
    %v317 = vunpack.c.l.b16 %v43
    %v318 = vunpack.c.l.b16 %v44
    %v319 = vunpack.c.l.b16 %v45
    %v320 = vunpack.c.l.b16 %v46
    %v321 = vunpack.c.l.b16 %v47
    %v322 = vunpack.c.l.b16 %v48
    %v323 = vunpack.c.l.b16 %v49
    %v324 = vunpack.c.l.b16 %v50
    %v325 = vunpack.c.l.b16 %v51
    %v326 = vunpack.c.l.b16 %v52
    %v327 = vunpack.c.l.b16 %v53
    %v328 = vunpack.c.l.b16 %v54
    %v329 = vunpack.c.l.b16 %v55
    %v330 = vunpack.c.l.b16 %v56
    %v331 = vunpack.c.l.b16 %v57
    %v332 = vunpack.c.l.b16 %v58
    %v333 = vunpack.c.l.b16 %v59
    %v334 = vunpack.c.l.b16 %v60
    %v335 = vunpack.c.l.b16 %v61
    %v336 = vunpack.c.l.b16 %v62
    %v337 = vunpack.c.l.b16 %v63
    %v338 = vunpack.c.l.b16 %v64
    %v339 = vunpack.c.l.b16 %v65
    %v340 = vunpack.c.l.b16 %v66
    %v341 = vunpack.c.l.b16 %v67
    %v342 = vunpack.c.l.b16 %v68
    %v343 = vunpack.c.l.b16 %v69
    %v344 = vunpack.c.l.b16 %v70
    %v345 = vunpack.c.l.b16 %v71
    %v346 = vunpack.c.l.b16 %v72
    %v347 = vunpack.c.l.b16 %v73
    %v348 = vunpack.c.l.b16 %v74
    %v349 = vunpack.c.l.b16 %v75
    %v350 = vunpack.c.l.b16 %v76
    %v351 = vunpack.c.l.b16 %v77
    %v352 = vunpack.c.l.b16 %v78
    %v353 = vunpack.c.l.b16 %v79
    %v354 = vunpack.c.l.b16 %v80
    %v355 = vunpack.c.l.b16 %v81
    %v356 = vunpack.c.l.b16 %v82
    %v357 = vunpack.c.l.b16 %v83
    %v358 = vunpack.c.l.b16 %v84
    %v359 = vunpack.c.l.b16 %v85
    %v360 = vunpack.c.l.b16 %v86
    %v361 = vunpack.c.l.b16 %v87
    %v362 = vunpack.c.l.b16 %v88
    %v363 = vunpack.c.l.b16 %v89
    %v364 = vunpack.c.l.b16 %v90
    %v365 = vunpack.c.l.b16 %v91
    %v366 = vunpack.c.l.b16 %v92
    %v367 = vunpack.c.l.b16 %v93
    %v368 = vunpack.c.l.b16 %v94
    %v369 = vunpack.c.l.b16 %v95
    %v370 = vunpack.c.l.b16 %v96
    %v371 = vunpack.c.l.b16 %v97
    %v372 = vunpack.c.l.b16 %v98
    %v373 = vunpack.c.l.b16 %v99
    %v374 = vunpack.c.l.b16 %v100
    %v375 = vunpack.c.l.b16 %v101
    %v376 = vunpack.c.l.b16 %v102
    %v377 = vunpack.c.l.b16 %v103
    %v378 = vunpack.c.l.b16 %v104
    %v379 = vunpack.c.l.b16 %v105
    %v380 = vunpack.c.l.b16 %v106
    %v381 = vunpack.c.l.b16 %v107
    %v382 = vunpack.c.l.b16 %v108
    %v383 = vunpack.c.l.b16 %v109
    %v384 = vunpack.c.l.b16 %v110
    %v385 = vunpack.c.l.b16 %v111
    %v386 = vunpack.c.l.b16 %v112
    %v387 = vunpack.c.l.b16 %v113
    %v388 = vunpack.c.l.b16 %v114
    %v389 = vunpack.c.l.b16 %v115
    %v390 = vunpack.c.l.b16 %v116
    %v391 = vunpack.c.l.b16 %v117
    %v392 = vunpack.c.l.b16 %v118
    %v393 = vunpack.c.l.b16 %v119
    %v394 = vunpack.c.l.b16 %v120
    %v395 = vunpack.c.l.b16 %v121
    %v396 = vunpack.c.l.b16 %v122
    %v397 = vunpack.c.l.b16 %v123
    %v398 = vunpack.c.l.b16 %v124
    %v399 = vunpack.c.l.b16 %v125
    %v400 = vunpack.c.l.b16 %v126
    %v401 = vunpack.c.l.b16 %v127
    %v402 = vunpack.c.l.b16 %v128
    %v403 = vunpack.c.l.b16 %v129
    %v404 = vunpack.c.l.b16 %v130
    %v405 = vunpack.c.l.b16 %v131
    %v406 = vunpack.c.l.b16 %v132
    %v407 = vunpack.c.l.b16 %v133
    %v408 = vunpack.c.l.b16 %v134
    %v409 = vunpack.c.l.b16 %v135
    %v410 = vunpack.c.l.b16 %v136
    %v411 = vunpack.c.l.b16 %v137
    %v412 = vunpack.c.l.b16 %v138
    %v413 = vunpack.c.l.b16 %v139
    %v414 = vunpack.c.l.b16 %v140
    %v415 = vunpack.c.l.b16 %v141
    %v416 = vunpack.c.l.b16 %v142
    %v417 = vunpack.c.l.b16 %v143
    %v418 = vunpack.c.l.b16 %v144
    %v419 = vunpack.c.l.b16 %v145
    %v420 = vunpack.c.l.b16 %v146
    %v421 = vunpack.c.l.b16 %v147
    %v422 = vunpack.c.l.b16 %v148
    %v423 = vunpack.c.l.b16 %v149
    %v424 = vunpack.c.l.b16 %v150
    %v425 = vunpack.c.l.b16 %v151
    %v426 = vunpack.c.l.b16 %v152
    %v427 = vunpack.c.l.b16 %v153
    %v428 = vunpack.c.l.b16 %v154
    %v429 = vunpack.c.l.b16 %v155
    %v430 = vunpack.c.l.b16 %v156
    %v431 = vunpack.c.l.b16 %v157
    %v432 = vunpack.c.l.b16 %v158
    %v433 = vunpack.c.l.b16 %v159
    %v434 = vunpack.c.l.b16 %v160
    %v435 = vunpack.c.l.b16 %v161
    %v436 = vunpack.c.l.b16 %v162
    %v437 = vunpack.c.l.b16 %v163
    %v438 = vunpack.c.l.b16 %v164
    %v439 = vunpack.c.l.b16 %v165
    %v440 = vpack.c.b16 %v313, %v312
    %v441 = vpack.c.b16 %v315, %v314
    %v442 = vpack.c.b16 %v317, %v316
    %v443 = vpack.c.b16 %v319, %v318
    %v444 = vpack.c.b16 %v321, %v320
    %v445 = vpack.c.b16 %v323, %v322
    %v446 = vpack.c.b16 %v325, %v324
    %v447 = vpack.c.b16 %v327, %v326
    %v448 = vpack.c.b16 %v329, %v328
    %v449 = vpack.c.b16 %v331, %v330
    %v450 = vpack.c.b16 %v333, %v332
    %v451 = vpack.c.b16 %v335, %v334
    %v452 = vpack.c.b16 %v337, %v336
    %v453 = vpack.c.b16 %v339, %v338
    %v454 = vpack.c.b16 %v341, %v340
    %v455 = vpack.c.b16 %v343, %v342
    %v456 = vpack.c.b16 %v345, %v344
    %v457 = vpack.c.b16 %v347, %v346
    %v458 = vpack.c.b16 %v349, %v348
    %v459 = vpack.c.b16 %v351, %v350
    %v460 = vpack.c.b16 %v353, %v352
    %v461 = vpack.c.b16 %v355, %v354
    %v462 = vpack.c.b16 %v357, %v356
    %v463 = vpack.c.b16 %v359, %v358
    %v464 = vpack.c.b16 %v361, %v360
    %v465 = vpack.c.b16 %v363, %v362
    %v466 = vpack.c.b16 %v365, %v364
    %v467 = vpack.c.b16 %v367, %v366
    %v468 = vpack.c.b16 %v369, %v368
    %v469 = vpack.c.b16 %v371, %v370
    %v470 = vpack.c.b16 %v373, %v372
    %v471 = vpack.c.b16 %v375, %v374
    %v472 = vpack.c.b16 %v377, %v376
    %v473 = vpack.c.b16 %v379, %v378
    %v474 = vpack.c.b16 %v381, %v380
    %v475 = vpack.c.b16 %v383, %v382
    %v476 = vpack.c.b16 %v385, %v384
    %v477 = vpack.c.b16 %v387, %v386
    %v478 = vpack.c.b16 %v389, %v388
    %v479 = vpack.c.b16 %v391, %v390
    %v480 = vpack.c.b16 %v393, %v392
    %v481 = vpack.c.b16 %v395, %v394
    %v482 = vpack.c.b16 %v397, %v396
    %v483 = vpack.c.b16 %v399, %v398
    %v484 = vpack.c.b16 %v401, %v400
    %v485 = vpack.c.b16 %v403, %v402
    %v486 = vpack.c.b16 %v405, %v404
    %v487 = vpack.c.b16 %v407, %v406
    %v488 = vpack.c.b16 %v409, %v408
    %v489 = vpack.c.b16 %v411, %v410
    %v490 = vpack.c.b16 %v413, %v412
    %v491 = vpack.c.b16 %v415, %v414
    %v492 = vpack.c.b16 %v417, %v416
    %v493 = vpack.c.b16 %v419, %v418
    %v494 = vpack.c.b16 %v421, %v420
    %v495 = vpack.c.b16 %v423, %v422
    %v496 = vpack.c.b16 %v425, %v424
    %v497 = vpack.c.b16 %v427, %v426
    %v498 = vpack.c.b16 %v429, %v428
    %v499 = vpack.c.b16 %v431, %v430
    %v500 = vpack.c.b16 %v433, %v432
    %v501 = vpack.c.b16 %v435, %v434
    %v502 = vpack.c.b16 %v437, %v436
    %v503 = vpack.c.b16 %v439, %v438
    %568 = vmatpush.bf16.msra.mxu0 %v447
    %569 = vmatpush.bf16.msra.mxu0 %v446
    %570 = vmatpush.bf16.msra.mxu0 %v445
    %571 = vmatpush.bf16.msra.mxu0 %v444
    %572 = vmatpush.bf16.msra.mxu0 %v443
    %573 = vmatpush.bf16.msra.mxu0 %v442
    %574 = vmatpush.bf16.msra.mxu0 %v441
    %575 = vmatpush.bf16.msra.mxu0 %v440
    %576 = vmatmul.bf16.gmra.mxu0 %v168
    %v577 = vpop.f32.mrf.mxu0
    %v578 = vadd.f32 0.0, %v577
    %v579 = vpop.f32.mrf.mxu0
    %580 = vdwg.mxu0
    %581 = vmatpush.bf16.msra.mxu0 %v455
    %582 = vmatpush.bf16.msra.mxu0 %v454
    %583 = vmatpush.bf16.msra.mxu0 %v453
    %584 = vmatpush.bf16.msra.mxu0 %v452
    %585 = vmatpush.bf16.msra.mxu0 %v451
    %586 = vmatpush.bf16.msra.mxu0 %v450
    %587 = vmatpush.bf16.msra.mxu0 %v449
    %588 = vmatpush.bf16.msra.mxu0 %v448
    %589 = vmatmul.bf16.gmra.mxu0 %v169
    %v590 = vpop.f32.mrf.mxu0
    %v591 = vadd.f32 %v578, %v590
    %v592 = vpop.f32.mrf.mxu0
    %593 = vdwg.mxu0
    %594 = vmatpush.bf16.msra.mxu0 %v463
    %595 = vmatpush.bf16.msra.mxu0 %v462
    %596 = vmatpush.bf16.msra.mxu0 %v461
    %597 = vmatpush.bf16.msra.mxu0 %v460
    %598 = vmatpush.bf16.msra.mxu0 %v459
    %599 = vmatpush.bf16.msra.mxu0 %v458
    %600 = vmatpush.bf16.msra.mxu0 %v457
    %601 = vmatpush.bf16.msra.mxu0 %v456
    %602 = vmatmul.bf16.gmra.mxu0 %v170
    %v603 = vpop.f32.mrf.mxu0
    %v604 = vadd.f32 %v591, %v603
    %v605 = vpop.f32.mrf.mxu0
    %606 = vdwg.mxu0
    %607 = vmatpush.bf16.msra.mxu0 %v471
    %608 = vmatpush.bf16.msra.mxu0 %v470
    %609 = vmatpush.bf16.msra.mxu0 %v469
    %610 = vmatpush.bf16.msra.mxu0 %v468
    %611 = vmatpush.bf16.msra.mxu0 %v467
    %612 = vmatpush.bf16.msra.mxu0 %v466
    %613 = vmatpush.bf16.msra.mxu0 %v465
    %614 = vmatpush.bf16.msra.mxu0 %v464
    %615 = vmatmul.bf16.gmra.mxu0 %v171
    %v616 = vpop.f32.mrf.mxu0
    %v617 = vadd.f32 %v604, %v616
    %v618 = vpop.f32.mrf.mxu0
    %619 = vdwg.mxu0
    %620 = vmatpush.bf16.msra.mxu0 %v479
    %621 = vmatpush.bf16.msra.mxu0 %v478
    %622 = vmatpush.bf16.msra.mxu0 %v477
    %623 = vmatpush.bf16.msra.mxu0 %v476
    %624 = vmatpush.bf16.msra.mxu0 %v475
    %625 = vmatpush.bf16.msra.mxu0 %v474
    %626 = vmatpush.bf16.msra.mxu0 %v473
    %627 = vmatpush.bf16.msra.mxu0 %v472
    %628 = vmatmul.bf16.gmra.mxu0 %v172
    %v629 = vpop.f32.mrf.mxu0
    %v630 = vadd.f32 %v617, %v629
    %v631 = vpop.f32.mrf.mxu0
    %632 = vdwg.mxu0
    %633 = vmatpush.bf16.msra.mxu0 %v487
    %634 = vmatpush.bf16.msra.mxu0 %v486
    %635 = vmatpush.bf16.msra.mxu0 %v485
    %636 = vmatpush.bf16.msra.mxu0 %v484
    %637 = vmatpush.bf16.msra.mxu0 %v483
    %638 = vmatpush.bf16.msra.mxu0 %v482
    %639 = vmatpush.bf16.msra.mxu0 %v481
    %640 = vmatpush.bf16.msra.mxu0 %v480
    %641 = vmatmul.bf16.gmra.mxu0 %v173
    %v642 = vpop.f32.mrf.mxu0
    %v643 = vadd.f32 %v630, %v642
    %v644 = vpop.f32.mrf.mxu0
    %645 = vdwg.mxu0
    %646 = vmatpush.bf16.msra.mxu0 %v495
    %647 = vmatpush.bf16.msra.mxu0 %v494
    %648 = vmatpush.bf16.msra.mxu0 %v493
    %649 = vmatpush.bf16.msra.mxu0 %v492
    %650 = vmatpush.bf16.msra.mxu0 %v491
    %651 = vmatpush.bf16.msra.mxu0 %v490
    %652 = vmatpush.bf16.msra.mxu0 %v489
    %653 = vmatpush.bf16.msra.mxu0 %v488
    %654 = vmatmul.bf16.gmra.mxu0 %v174
    %v655 = vpop.f32.mrf.mxu0
    %v656 = vadd.f32 %v643, %v655
    %v657 = vpop.f32.mrf.mxu0
    %658 = vdwg.mxu0
    %659 = vmatpush.bf16.msra.mxu0 %v503
    %660 = vmatpush.bf16.msra.mxu0 %v502
    %661 = vmatpush.bf16.msra.mxu0 %v501
    %662 = vmatpush.bf16.msra.mxu0 %v500
    %663 = vmatpush.bf16.msra.mxu0 %v499
    %664 = vmatpush.bf16.msra.mxu0 %v498
    %665 = vmatpush.bf16.msra.mxu0 %v497
    %666 = vmatpush.bf16.msra.mxu0 %v496
    %667 = vmatmul.bf16.gmra.mxu0 %v175
    %v668 = vpop.f32.mrf.mxu0
    %v669 = vadd.f32 %v656, %v668
    %v670 = vpop.f32.mrf.mxu0
    %671 = vdwg.mxu0
    %v672 = vadd.f32 %v36, %v669
    %673 = vst [vmem:[#allocation2] sm:$0x3] %v672
    // Predicated region
    $region22: #{fully_connected_forward.1} parent=1 // pred_check
      %p674 = pneg %p31
    $region23: #{fully_connected_forward.1} parent=1 // pred_check_branch
      %676 = sbr.rel (%p674) target = $region25
    $region24: #{fully_connected_forward.1} parent=1 // pred_region
      %v677 = vld [vmem:[#allocation2] sm:$0x3]
      %v678 = vld [vmem:[%s2] sm:$0x1]
      %v680 = vperm.slane %v678, 0
      %v682 = vadd.f32 %v677, %v680
      %683 = vst [vmem:[#allocation6] sm:$0x3] %v682
    $region25: #{fully_connected_forward.1} parent=1 // pred_fallthru
      _
    // Predicated region
    $region26: #{fully_connected_forward.1} parent=1 // pred_check
      _
    $region27: #{fully_connected_forward.1} parent=1 // pred_check_branch
      %685 = sbr.rel (0) target = $region29
    $region28: #{fully_connected_forward.1} parent=1 // pred_region
      %687 = vsyncadd [#allocation5], 0
      %s689 = sshll.u32 [#allocation6], 4
      %s690 = int_to_ptr.vmem [resolvable:$true] %s689
      %s691 = sshll.u32 %s3, 4
      %s692 = int_to_ptr.hbm [resolvable:$true] %s691
      %694 = dma.vmem_to_hbm [thread:$0]  %s690, 32, %s692, [#allocation5]
    $region29: #{fully_connected_forward.1} parent=1 // pred_fallthru
      _
    // Predicated region
    $region30: #{fully_connected_forward.1} parent=1 // pred_check
      _
    $region31: #{fully_connected_forward.1} parent=1 // pred_check_branch
      %696 = sbr.rel (0) target = $region33
    $region32: #{fully_connected_forward.1} parent=1 // pred_region
      %698 = dma.done [#allocation5], 32
    $region33: #{fully_connected_forward.1} parent=1 // pred_fallthru
      _
    %699 = vsyncpa [#allocation4], 1
    %700 = vsyncpa [#allocation5], 1

</llo_original>
